<compile_context>
chip_gen: v7x
topology: tpu7x:2x2x1
jax: 0.10.0
libtpu: 0.0.40
codegen_flags: <defaults>
</compile_context>

<pallas_src>
import functools

import jax
import jax.numpy as jnp
from jax.experimental import pallas as pl
from jax.experimental.pallas import tpu as pltpu

LN_EPS = 1e-5

_VMEM_WORKING_BUDGET = 48 * 1024 * 1024   # keep the working set under this (v7x: 64 MiB/TC)
_VMEM_LIMIT_CAP = 56 * 1024 * 1024        # never request scoped VMEM above this


def _round_up(x, m):
    return ((x + m - 1) // m) * m


def _vmem_bytes(tm, K, N_pad, in_isz, out_isz):
    """Estimated VMEM working set for one grid step."""
    w = K * N_pad * in_isz            # resident weight, single-buffered
    xb = 2 * tm * K * in_isz          # x tile, double-buffered
    ob = 2 * tm * N_pad * out_isz     # out tile, double-buffered
    yb = tm * N_pad * 4               # f32 LN intermediate (compiler scratch)
    pb = 3 * N_pad * in_isz           # packed bias/gamma/beta, single-buffered
    return w + xb + ob + yb + pb


def _linear_relu_ln_kernel(x_ref, w_ref, p_ref, o_ref, *, inv_n):
    # x: [TM, K] bf16, w: [K, N_pad] bf16, p: [3, N_pad] bf16 (rows: bias, gamma, beta),
    # o: [TM, N_pad] bf16.  bf16 operands straight to the MXU, f32 accumulation.
    y = jnp.dot(x_ref[...], w_ref[...], preferred_element_type=jnp.float32)
    y = y + p_ref[0:1, :].astype(jnp.float32)      # bias
    y = jnp.maximum(y, 0.0)                        # ReLU

    # LayerNorm over the true feature count N.  Padded lanes of y are exactly zero
    # (zero weight columns + zero bias -> ReLU(0) = 0), so plain sums over N_pad equal
    # sums over N.  One-pass E[y^2] - mean^2 in f32 (fine within bf16 output tolerance;
    # switch to two-pass (y - mean)^2 with a lane mask if tighter parity is needed).
    s1 = jnp.sum(y, axis=-1, keepdims=True)
    s2 = jnp.sum(y * y, axis=-1, keepdims=True)
    mean = s1 * inv_n
    var = jnp.maximum(s2 * inv_n - mean * mean, 0.0)
    inv = jax.lax.rsqrt(var + LN_EPS)

    out = (y - mean) * inv * p_ref[1:2, :].astype(jnp.float32) \
        + p_ref[2:3, :].astype(jnp.float32)
    o_ref[...] = out.astype(o_ref.dtype)


def prepare_params(weight, bias, gamma, beta):
    """One-time parameter prep (hoisted out of the per-call path).

    weight: [N, K] (PyTorch nn.Linear layout); bias/gamma/beta: [N].
    Returns (w_t [K, N_pad], pgb [3, N_pad], N).  Padded columns/lanes are exactly
    zero -- the LN-over-padded-lanes trick in the kernel depends on this.
    """
    N, K = weight.shape
    N_pad = _round_up(N, 128)
    w_t = weight.T                                    # [K, N] -> lane-dense out features
    if N_pad != N:
        w_t = jnp.pad(w_t, ((0, 0), (0, N_pad - N)))
        bias = jnp.pad(bias, (0, N_pad - N))
        gamma = jnp.pad(gamma, (0, N_pad - N))
        beta = jnp.pad(beta, (0, N_pad - N))
    pgb = jnp.stack([bias, gamma, beta], axis=0)      # [3, N_pad]
    return w_t, pgb, N


def linear_with_activation(x, w_t, pgb, n_features, *, tm=512):
    """x: [..., K]; w_t: [K, N_pad] (from prepare_params); pgb: [3, N_pad]; n_features: true N."""
    orig_shape = x.shape
    K = orig_shape[-1]
    K_w, N_pad = w_t.shape
    assert K == K_w, "x feature dim must match prepared weight"
    N = int(n_features)
    M = 1
    for d in orig_shape[:-1]:
        M *= d

    in_isz = jnp.dtype(x.dtype).itemsize
    out_isz = in_isz

    # Row tile: multiple of 8; aim for >= ~4 grid steps so the "parallel" M axis can
    # shard across v7x's 2 TensorCores; shrink until the VMEM working set fits.
    TM = min(tm, _round_up(max(1, pl.cdiv(M, 4)), 8))
    TM = max(TM, 8)
    while TM > 8 and _vmem_bytes(TM, K, N_pad, in_isz, out_isz) > _VMEM_WORKING_BUDGET:
        TM = max(8, _round_up(TM // 2, 8))

    needed = _vmem_bytes(TM, K, N_pad, in_isz, out_isz)
    vmem_limit = int(min(_VMEM_LIMIT_CAP,
                         max(2 * needed + (1 << 20), 32 * 1024 * 1024)))

    x2d = x.reshape(M, K)                 # metadata reshape, no HBM pass
    grid_m = pl.cdiv(M, TM)               # ragged last tile: OOB rows never written back

    kernel = functools.partial(_linear_relu_ln_kernel, inv_n=1.0 / float(N))

    def _call(single_buffer_resident):
        resident = ({"pipeline_mode": pl.Buffered(1)}
                    if single_buffer_resident else {})
        return pl.pallas_call(
            kernel,
            out_shape=jax.ShapeDtypeStruct((M, N_pad), x.dtype),
            grid_spec=pltpu.PrefetchScalarGridSpec(
                num_scalar_prefetch=0,
                grid=(grid_m,),
                in_specs=[
                    pl.BlockSpec((TM, K), lambda i: (i, 0)),          # x streams over M
                    pl.BlockSpec((K, N_pad), lambda i: (0, 0),
                                 **resident),                         # weight resident
                    pl.BlockSpec((3, N_pad), lambda i: (0, 0),
                                 **resident),                         # bias/gamma/beta
                ],
                out_specs=pl.BlockSpec((TM, N_pad), lambda i: (i, 0)),
            ),
            compiler_params=pltpu.CompilerParams(
                dimension_semantics=("parallel",),
                vmem_limit_bytes=vmem_limit),
        )(x2d, w_t, pgb)

    try:
        out2d = _call(True)
    except Exception:
        # Fallback for JAX versions without BlockSpec pipeline_mode support.
        out2d = _call(False)

    if N_pad != N:
        # NOTE: if the consumer can take the padded (M, N_pad) slab, return out2d
        # directly and skip this extra pass over the output.
        out2d = out2d[:, :N]
    return out2d.reshape(*orig_shape[:-1], N)


if __name__ == "__main__":
    # Small shapes consistent with the module: batch=2, seq=8, in=32, out=32.
    batch, seq, in_features, out_features = 2, 8, 32, 32
    dtype = jnp.bfloat16

    key = jax.random.PRNGKey(0)
    kx, kw, kb = jax.random.split(key, 3)

    x = jax.random.normal(kx, (batch, seq, in_features),
                          dtype=jnp.float32).astype(dtype)

    # Deterministic parameter init (shapes from nn.Linear / nn.LayerNorm __init__).
    bound = 1.0 / (in_features ** 0.5)
    weight = jax.random.uniform(kw, (out_features, in_features),
                                minval=-bound, maxval=bound,
                                dtype=jnp.float32).astype(dtype)
    bias = jax.random.uniform(kb, (out_features,),
                              minval=-bound, maxval=bound,
                              dtype=jnp.float32).astype(dtype)
    gamma = jnp.ones((out_features,), dtype=dtype)   # LayerNorm weight init
    beta = jnp.zeros((out_features,), dtype=dtype)   # LayerNorm bias init

    # One-time parameter prep (transpose / pad / pack), then the fused kernel call.
    w_t, pgb, n_feat = prepare_params(weight, bias, gamma, beta)
    out = linear_with_activation(x, w_t, pgb, n_feat)
    jax.block_until_ready(out)

    # Sanity check against a pure-JAX reference.
    xf = x.astype(jnp.float32)
    yf = jnp.maximum(xf @ weight.T.astype(jnp.float32)
                     + bias.astype(jnp.float32), 0.0)
    mean = jnp.mean(yf, axis=-1, keepdims=True)
    var = jnp.mean((yf - mean) ** 2, axis=-1, keepdims=True)
    ref = ((yf - mean) * jax.lax.rsqrt(var + LN_EPS)
           * gamma.astype(jnp.float32) + beta.astype(jnp.float32))
    assert out.shape == (batch, seq, out_features)
    assert out.dtype == dtype
    assert jnp.max(jnp.abs(out.astype(jnp.float32) - ref)) < 5e-2

    print("KERNEL_OK")
</pallas_src>

<mosaic_0001>
module attributes {stable_mosaic.version = 11 : i64} {
  func.func @_linear_relu_ln_kernel(%arg0: i32, %arg1: memref<8x32xbf16, #tpu.memory_space<vmem>>, %arg2: memref<32x128xbf16, #tpu.memory_space<vmem>>, %arg3: memref<3x128xbf16, #tpu.memory_space<vmem>>, %arg4: memref<8x128xbf16, #tpu.memory_space<vmem>>) attributes {dimension_semantics = [#tpu.dimension_semantics<parallel>], iteration_bounds = array<i64: 2>, scalar_prefetch = 0 : i64, scratch_operands = 0 : i64, tpu.core_type = #tpu.core_type<tc>, window_params = [{transform_indices = @transform_0, window_bounds = array<i64: 8, 32>}, {pipeline_mode = #tpu.pipeline_mode<synchronous>, transform_indices = @transform_1, window_bounds = array<i64: 32, 128>}, {pipeline_mode = #tpu.pipeline_mode<synchronous>, transform_indices = @transform_2, window_bounds = array<i64: 3, 128>}, {transform_indices = @transform_3, window_bounds = array<i64: 8, 128>}]} {
    %c0 = arith.constant 0 : index
    %c0_0 = arith.constant 0 : index
    %0 = vector.load %arg1[%c0, %c0_0] : memref<8x32xbf16, #tpu.memory_space<vmem>>, vector<8x32xbf16>
    %c0_1 = arith.constant 0 : index
    %c0_2 = arith.constant 0 : index
    %1 = vector.load %arg2[%c0_1, %c0_2] : memref<32x128xbf16, #tpu.memory_space<vmem>>, vector<32x128xbf16>
    %cst = arith.constant dense<0.000000e+00> : vector<8x128xf32>
    %2 = tpu.matmul %0, %1, %cst {dimension_numbers = #tpu.dot_dimension_numbers<[1], [0], [0], [1], [0, 0, 1, 1], [], []>} : vector<8x32xbf16>, vector<32x128xbf16>, vector<8x128xf32> -> vector<8x128xf32>
    %c0_3 = arith.constant 0 : index
    %c0_4 = arith.constant 0 : index
    %3 = vector.load %arg3[%c0_3, %c0_4] : memref<3x128xbf16, #tpu.memory_space<vmem>>, vector<1x128xbf16>
    %4 = arith.extf %3 : vector<1x128xbf16> to vector<1x128xf32>
    %5 = vector.broadcast %4 : vector<1x128xf32> to vector<8x128xf32>
    %6 = arith.addf %2, %5 : vector<8x128xf32>
    %cst_5 = arith.constant 0.000000e+00 : f32
    %7 = vector.broadcast %cst_5 : f32 to vector<8x128xf32>
    %8 = arith.maximumf %6, %7 : vector<8x128xf32>
    %cst_6 = arith.constant dense<0.000000e+00> : vector<8xf32>
    %9 = vector.multi_reduction <add>, %8, %cst_6 [1] : vector<8x128xf32> to vector<8xf32>
    %10 = vector.shape_cast %9 : vector<8xf32> to vector<8x1xf32>
    %11 = arith.mulf %8, %8 : vector<8x128xf32>
    %cst_7 = arith.constant dense<0.000000e+00> : vector<8xf32>
    %12 = vector.multi_reduction <add>, %11, %cst_7 [1] : vector<8x128xf32> to vector<8xf32>
    %13 = vector.shape_cast %12 : vector<8xf32> to vector<8x1xf32>
    %cst_8 = arith.constant 3.125000e-02 : f32
    %14 = vector.broadcast %cst_8 : f32 to vector<8x1xf32>
    %15 = arith.mulf %10, %14 : vector<8x1xf32>
    %cst_9 = arith.constant 3.125000e-02 : f32
    %16 = vector.broadcast %cst_9 : f32 to vector<8x1xf32>
    %17 = arith.mulf %13, %16 : vector<8x1xf32>
    %18 = arith.mulf %15, %15 : vector<8x1xf32>
    %19 = arith.subf %17, %18 : vector<8x1xf32>
    %cst_10 = arith.constant 0.000000e+00 : f32
    %20 = vector.broadcast %cst_10 : f32 to vector<8x1xf32>
    %21 = arith.maximumf %19, %20 : vector<8x1xf32>
    %cst_11 = arith.constant 9.99999974E-6 : f32
    %22 = vector.broadcast %cst_11 : f32 to vector<8x1xf32>
    %23 = arith.addf %21, %22 : vector<8x1xf32>
    %24 = math.rsqrt %23 : vector<8x1xf32>
    %25 = vector.broadcast %15 : vector<8x1xf32> to vector<8x128xf32>
    %26 = arith.subf %8, %25 : vector<8x128xf32>
    %27 = vector.broadcast %24 : vector<8x1xf32> to vector<8x128xf32>
    %28 = arith.mulf %26, %27 : vector<8x128xf32>
    %c1 = arith.constant 1 : index
    %c0_12 = arith.constant 0 : index
    %29 = vector.load %arg3[%c1, %c0_12] : memref<3x128xbf16, #tpu.memory_space<vmem>>, vector<1x128xbf16>
    %30 = arith.extf %29 : vector<1x128xbf16> to vector<1x128xf32>
    %31 = vector.broadcast %30 : vector<1x128xf32> to vector<8x128xf32>
    %32 = arith.mulf %28, %31 : vector<8x128xf32>
    %c2 = arith.constant 2 : index
    %c0_13 = arith.constant 0 : index
    %33 = vector.load %arg3[%c2, %c0_13] : memref<3x128xbf16, #tpu.memory_space<vmem>>, vector<1x128xbf16>
    %34 = arith.extf %33 : vector<1x128xbf16> to vector<1x128xf32>
    %35 = vector.broadcast %34 : vector<1x128xf32> to vector<8x128xf32>
    %36 = arith.addf %32, %35 : vector<8x128xf32>
    %37 = arith.truncf %36 : vector<8x128xf32> to vector<8x128xbf16>
    %c0_14 = arith.constant 0 : index
    %c0_15 = arith.constant 0 : index
    %38 = vector.load %arg4[%c0_14, %c0_15] : memref<8x128xbf16, #tpu.memory_space<vmem>>, vector<8x128xbf16>
    tpu.vector_store %arg4[%c0_14, %c0_15], %37 {strides = array<i32>} : memref<8x128xbf16, #tpu.memory_space<vmem>>, vector<8x128xbf16>,
    return
  }
  func.func @transform_0(%arg0: i32) -> (i32, i32) {
    %c0_i32 = arith.constant 0 : i32
    %c0_i32_0 = arith.constant 0 : i32
    return %arg0, %c0_i32 : i32, i32
  }
  func.func @transform_1(%arg0: i32) -> (i32, i32) {
    %c0_i32 = arith.constant 0 : i32
    %c0_i32_0 = arith.constant 0 : i32
    %c0_i32_1 = arith.constant 0 : i32
    return %c0_i32, %c0_i32_0 : i32, i32
  }
  func.func @transform_2(%arg0: i32) -> (i32, i32) {
    %c0_i32 = arith.constant 0 : i32
    %c0_i32_0 = arith.constant 0 : i32
    %c0_i32_1 = arith.constant 0 : i32
    return %c0_i32, %c0_i32_0 : i32, i32
  }
  func.func @transform_3(%arg0: i32) -> (i32, i32) {
    %c0_i32 = arith.constant 0 : i32
    %c0_i32_0 = arith.constant 0 : i32
    return %arg0, %c0_i32 : i32, i32
  }
}

module attributes {stable_mosaic.version = 11 : i64} {
  func.func @_linear_relu_ln_kernel(%arg0: i32, %arg1: memref<8x32xbf16, #tpu.memory_space<vmem>>, %arg2: memref<32x128xbf16, #tpu.memory_space<vmem>>, %arg3: memref<3x128xbf16, #tpu.memory_space<vmem>>, %arg4: memref<8x128xbf16, #tpu.memory_space<vmem>>) attributes {dimension_semantics = [#tpu.dimension_semantics<parallel>], iteration_bounds = array<i64: 2>, scalar_prefetch = 0 : i64, scratch_operands = 0 : i64, tpu.core_type = #tpu.core_type<tc>, window_params = [{transform_indices = @transform_0, window_bounds = array<i64: 8, 32>}, {pipeline_mode = #tpu.pipeline_mode<synchronous>, transform_indices = @transform_1, window_bounds = array<i64: 32, 128>}, {pipeline_mode = #tpu.pipeline_mode<synchronous>, transform_indices = @transform_2, window_bounds = array<i64: 3, 128>}, {transform_indices = @transform_3, window_bounds = array<i64: 8, 128>}]} {
    %c0 = arith.constant 0 : index
    %c0_0 = arith.constant 0 : index
    %0 = vector.load %arg1[%c0, %c0_0] : memref<8x32xbf16, #tpu.memory_space<vmem>>, vector<8x32xbf16>
    %c0_1 = arith.constant 0 : index
    %c0_2 = arith.constant 0 : index
    %1 = vector.load %arg2[%c0_1, %c0_2] : memref<32x128xbf16, #tpu.memory_space<vmem>>, vector<32x128xbf16>
    %cst = arith.constant dense<0.000000e+00> : vector<8x128xf32>
    %2 = tpu.matmul %0, %1, %cst {dimension_numbers = #tpu.dot_dimension_numbers<[1], [0], [0], [1], [0, 0, 1, 1], [], []>} : vector<8x32xbf16>, vector<32x128xbf16>, vector<8x128xf32> -> vector<8x128xf32>
    %c0_3 = arith.constant 0 : index
    %c0_4 = arith.constant 0 : index
    %3 = vector.load %arg3[%c0_3, %c0_4] : memref<3x128xbf16, #tpu.memory_space<vmem>>, vector<1x128xbf16>
    %4 = arith.extf %3 : vector<1x128xbf16> to vector<1x128xf32>
    %5 = vector.broadcast %4 : vector<1x128xf32> to vector<8x128xf32>
    %6 = arith.addf %2, %5 : vector<8x128xf32>
    %cst_5 = arith.constant 0.000000e+00 : f32
    %7 = vector.broadcast %cst_5 : f32 to vector<8x128xf32>
    %8 = arith.maximumf %6, %7 : vector<8x128xf32>
    %cst_6 = arith.constant dense<0.000000e+00> : vector<8xf32>
    %9 = vector.multi_reduction <add>, %8, %cst_6 [1] : vector<8x128xf32> to vector<8xf32>
    %10 = vector.shape_cast %9 : vector<8xf32> to vector<8x1xf32>
    %11 = arith.mulf %8, %8 : vector<8x128xf32>
    %cst_7 = arith.constant dense<0.000000e+00> : vector<8xf32>
    %12 = vector.multi_reduction <add>, %11, %cst_7 [1] : vector<8x128xf32> to vector<8xf32>
    %13 = vector.shape_cast %12 : vector<8xf32> to vector<8x1xf32>
    %cst_8 = arith.constant 3.125000e-02 : f32
    %14 = vector.broadcast %cst_8 : f32 to vector<8x1xf32>
    %15 = arith.mulf %10, %14 : vector<8x1xf32>
    %cst_9 = arith.constant 3.125000e-02 : f32
    %16 = vector.broadcast %cst_9 : f32 to vector<8x1xf32>
    %17 = arith.mulf %13, %16 : vector<8x1xf32>
    %18 = arith.mulf %15, %15 : vector<8x1xf32>
    %19 = arith.subf %17, %18 : vector<8x1xf32>
    %cst_10 = arith.constant 0.000000e+00 : f32
    %20 = vector.broadcast %cst_10 : f32 to vector<8x1xf32>
    %21 = arith.maximumf %19, %20 : vector<8x1xf32>
    %cst_11 = arith.constant 9.99999974E-6 : f32
    %22 = vector.broadcast %cst_11 : f32 to vector<8x1xf32>
    %23 = arith.addf %21, %22 : vector<8x1xf32>
    %24 = math.rsqrt %23 : vector<8x1xf32>
    %25 = vector.broadcast %15 : vector<8x1xf32> to vector<8x128xf32>
    %26 = arith.subf %8, %25 : vector<8x128xf32>
    %27 = vector.broadcast %24 : vector<8x1xf32> to vector<8x128xf32>
    %28 = arith.mulf %26, %27 : vector<8x128xf32>
    %c1 = arith.constant 1 : index
    %c0_12 = arith.constant 0 : index
    %29 = vector.load %arg3[%c1, %c0_12] : memref<3x128xbf16, #tpu.memory_space<vmem>>, vector<1x128xbf16>
    %30 = arith.extf %29 : vector<1x128xbf16> to vector<1x128xf32>
    %31 = vector.broadcast %30 : vector<1x128xf32> to vector<8x128xf32>
    %32 = arith.mulf %28, %31 : vector<8x128xf32>
    %c2 = arith.constant 2 : index
    %c0_13 = arith.constant 0 : index
    %33 = vector.load %arg3[%c2, %c0_13] : memref<3x128xbf16, #tpu.memory_space<vmem>>, vector<1x128xbf16>
    %34 = arith.extf %33 : vector<1x128xbf16> to vector<1x128xf32>
    %35 = vector.broadcast %34 : vector<1x128xf32> to vector<8x128xf32>
    %36 = arith.addf %32, %35 : vector<8x128xf32>
    %37 = arith.truncf %36 : vector<8x128xf32> to vector<8x128xbf16>
    %c0_14 = arith.constant 0 : index
    %c0_15 = arith.constant 0 : index
    %38 = vector.load %arg4[%c0_14, %c0_15] : memref<8x128xbf16, #tpu.memory_space<vmem>>, vector<8x128xbf16>
    tpu.vector_store %arg4[%c0_14, %c0_15], %37 {strides = array<i32>} : memref<8x128xbf16, #tpu.memory_space<vmem>>, vector<8x128xbf16>,
    return
  }
  func.func @transform_0(%arg0: i32) -> (i32, i32) {
    %c0_i32 = arith.constant 0 : i32
    %c0_i32_0 = arith.constant 0 : i32
    return %arg0, %c0_i32 : i32, i32
  }
  func.func @transform_1(%arg0: i32) -> (i32, i32) {
    %c0_i32 = arith.constant 0 : i32
    %c0_i32_0 = arith.constant 0 : i32
    %c0_i32_1 = arith.constant 0 : i32
    return %c0_i32, %c0_i32_0 : i32, i32
  }
  func.func @transform_2(%arg0: i32) -> (i32, i32) {
    %c0_i32 = arith.constant 0 : i32
    %c0_i32_0 = arith.constant 0 : i32
    %c0_i32_1 = arith.constant 0 : i32
    return %c0_i32, %c0_i32_0 : i32, i32
  }
  func.func @transform_3(%arg0: i32) -> (i32, i32) {
    %c0_i32 = arith.constant 0 : i32
    %c0_i32_0 = arith.constant 0 : i32
    return %arg0, %c0_i32 : i32, i32
  }
}

</mosaic_0001>

<llo_original>
// kernel: tpu_custom_call.1
$region0: #{tpu_custom_call.1}
  #allocation0 [shape = 'u32[]', space=smem, size = 0x4, offset = 0x4, fixed_abs, tag = 'smem constant byte address 0x4 - core index']
  #allocation1 [shape = 'u32[144,128]{1,0:T(1,128)}', space=vmem, size = 0x12000, scoped, tag = 'internal scratch']
  %s0 = inlined_call_operand.hbm [shape: bf16[16,32], index: 0, kind: input, shape index: {}]
  %s1 = inlined_call_operand.hbm [shape: bf16[32,128], index: 1, kind: input, shape index: {}]
  %s2 = inlined_call_operand.vmem [shape: bf16[3,128], index: 2, kind: input, shape index: {}]
  %s3 = inlined_call_operand.hbm [shape: bf16[16,128], index: 3, kind: output, shape index: {}]
  %s4 = sld [smem:[#allocation0]]
  $region53: #{tpu_custom_call.1} parent=0
    _
  %s6 = ssub.s32 1, %s4
  %s7 = scalar_select 0, %s6, %s4
  $region1: #{tpu_custom_call.1} parent=0
    #allocation2 [shape = 'u8[4096]{0}', space=vmem, size = 0x1000, scoped, tag = 'input window, operand 0']
    #allocation3 [shape = 's32[2]{0}', space=sflag, size = 0x8, scoped, tag = 'scoped memory for tpu_custom_call.1']
    #allocation4 [shape = 's32[2]{0}', space=sflag, size = 0x8, scoped, tag = 'scoped memory for tpu_custom_call.1']
    #allocation5 [shape = 'u8[8192]{0}', space=vmem, size = 0x2000, scoped, tag = 'input window, operand 1, single buffered']
    #allocation6 [shape = 's32[1]{0}', space=sflag, size = 0x4, scoped, tag = 'scoped memory for tpu_custom_call.1']
    #allocation7 [shape = 'u8[4096]{0}', space=vmem, size = 0x1000, scoped, tag = 'output window, operand 0']
    %8 = vsyncpa [#allocation3], 0
    %s9 = scalar_lea.sflag [#allocation3], 1
    %10 = vsyncpa %s9, 0
    %11 = vsyncpa [#allocation6], 0
    %12 = vsyncpa [#allocation4], 0
    %s13 = scalar_lea.sflag [#allocation4], 1
    %14 = vsyncpa %s13, 0
    loop: start=0, step=1, limit=4
    $region2: #{tpu_custom_call.1} parent=1 // loop_pre_header
      _
    $region3: #{tpu_custom_call.1} parent=1 // loop_header
      %s16 = sphi 0, %s20
      %p17 = scmp.ge.s32.totalorder %s16, 4
      %s26 = sphi 0, %s28
      %s29 = sphi 0, %s26
      %s30 = sphi 0, %s29
      %s46 = sphi 0, %s30
      %s50 = sphi 0, %s50
      %s52 = sphi 0, %s50
      %s53 = sphi 0, %s52
      %s67 = sphi 0, %s53
      %s71 = sphi 0, %s71
      %s73 = sphi 0, %s71
      %s74 = sphi 0, %s73
      %s88 = sphi 0, %s74
      %s94 = sphi 0, %s96
      %s97 = sphi 0, %s94
      %s98 = sphi 0, %s97
      %s114 = sphi 0, %s98
    $region4: #{tpu_custom_call.1} parent=1 // loop_header_branch
      %19 = sbr.rel (%p17) target = $region8
    $region5: #{tpu_custom_call.1} parent=1 // loop_body
      %s21 = ssub.s32 %s16, 1
      %s22 = ssub.s32 %s16, 2
      %s23 = sadd.s32 %s16, 1
      %s24 = ssub.s32 %s16, %s23
      %p25 = scmp.eq.s32.totalorder %s24, 0
      %s27 = sadd.s32 %s26, 1
      %s28 = scalar_select %p25, %s26, %s27
      %p31 = pneg %p25
      %p32 = scmp.eq.s32.totalorder %s16, 1
      %p33 = por %p31, %p32
      %p34 = scmp.ne.s32.totalorder %s26, %s29
      %p35 = scmp.eq.s32.totalorder %s16, 0
      %p36 = por %p34, %p35
      %p37 = scmp.ne.s32.totalorder %s26, %s29
      %p38 = scmp.eq.s32.totalorder %s21, 1
      %p39 = por %p37, %p38
      %p40 = scmp.ne.s32.totalorder %s29, %s30
      %p41 = scmp.eq.s32.totalorder %s21, 0
      %p42 = por %p40, %p41
      %p43 = scmp.ne.s32.totalorder %s29, %s30
      %p44 = scmp.eq.s32.totalorder %s22, 1
      %p45 = por %p43, %p44
      %p47 = scmp.ne.s32.totalorder %s30, %s46
      %p48 = scmp.eq.s32.totalorder %s22, 0
      %p49 = por %p47, %p48
      %s51 = sadd.s32 %s50, 1
      %p54 = scmp.eq.s32.totalorder %s16, 1
      %p55 = scmp.ne.s32.totalorder %s50, %s52
      %p56 = scmp.eq.s32.totalorder %s16, 0
      %p57 = por %p55, %p56
      %p58 = scmp.ne.s32.totalorder %s50, %s52
      %p59 = scmp.eq.s32.totalorder %s21, 1
      %p60 = por %p58, %p59
      %p61 = scmp.ne.s32.totalorder %s52, %s53
      %p62 = scmp.eq.s32.totalorder %s21, 0
      %p63 = por %p61, %p62
      %p64 = scmp.ne.s32.totalorder %s52, %s53
      %p65 = scmp.eq.s32.totalorder %s22, 1
      %p66 = por %p64, %p65
      %p68 = scmp.ne.s32.totalorder %s53, %s67
      %p69 = scmp.eq.s32.totalorder %s22, 0
      %p70 = por %p68, %p69
      %s72 = sadd.s32 %s71, 1
      %p75 = scmp.eq.s32.totalorder %s16, 1
      %p76 = scmp.ne.s32.totalorder %s71, %s73
      %p77 = scmp.eq.s32.totalorder %s16, 0
      %p78 = por %p76, %p77
      %p79 = scmp.ne.s32.totalorder %s71, %s73
      %p80 = scmp.eq.s32.totalorder %s21, 1
      %p81 = por %p79, %p80
      %p82 = scmp.ne.s32.totalorder %s73, %s74
      %p83 = scmp.eq.s32.totalorder %s21, 0
      %p84 = por %p82, %p83
      %p85 = scmp.ne.s32.totalorder %s73, %s74
      %p86 = scmp.eq.s32.totalorder %s22, 1
      %p87 = por %p85, %p86
      %p89 = scmp.ne.s32.totalorder %s74, %s88
      %p90 = scmp.eq.s32.totalorder %s22, 0
      %p91 = por %p89, %p90
      %s92 = ssub.s32 %s16, %s23
      %p93 = scmp.eq.s32.totalorder %s92, 0
      %s95 = sadd.s32 %s94, 1
      %s96 = scalar_select %p93, %s94, %s95
      %p99 = pneg %p93
      %p100 = scmp.eq.s32.totalorder %s16, 1
      %p101 = por %p99, %p100
      %p102 = scmp.ne.s32.totalorder %s94, %s97
      %p103 = scmp.eq.s32.totalorder %s16, 0
      %p104 = por %p102, %p103
      %p105 = scmp.ne.s32.totalorder %s94, %s97
      %p106 = scmp.eq.s32.totalorder %s21, 1
      %p107 = por %p105, %p106
      %p108 = scmp.ne.s32.totalorder %s97, %s98
      %p109 = scmp.eq.s32.totalorder %s21, 0
      %p110 = por %p108, %p109
      %p111 = scmp.ne.s32.totalorder %s97, %s98
      %p112 = scmp.eq.s32.totalorder %s22, 1
      %p113 = por %p111, %p112
      %p115 = scmp.ne.s32.totalorder %s98, %s114
      %p116 = scmp.eq.s32.totalorder %s22, 0
      %p117 = por %p115, %p116
      %p118 = scmp.le.s32.totalorder 1, %s16
      %p119 = scmp.lt.s32.totalorder %s16, 3
      %p120 = pnand %p118, %p119
      %p121 = pneg %p120
      // Predicated region
      $region9: #{tpu_custom_call.1} parent=5 // pred_check
        _
      $region10: #{tpu_custom_call.1} parent=5 // pred_check_branch
        %123 = sbr.rel (%p120) target = $region12
      $region11: #{tpu_custom_call.1} parent=5 // pred_region
        %s124 = ssub.s32 %s16, 1
        // Predicated region
        $region13: #{tpu_custom_call.1} parent=11 // pred_check
          %p125 = pneg %p63
        $region14: #{tpu_custom_call.1} parent=11 // pred_check_branch
          %127 = sbr.rel (%p125) target = $region16
        $region15: #{tpu_custom_call.1} parent=11 // pred_region
          %s129 = ssub.s32 256, 256
          %130 = vsyncadd [#allocation6], %s129
          %s131 = sshll.u32 [#allocation5], 4
          %s132 = int_to_ptr.vmem [resolvable:$true] %s131
          %137 = dma.hbm_to_vmem [thread:$0]  %s1, 256, %s132, [#allocation6], 64, 64, 4
        $region16: #{tpu_custom_call.1} parent=11 // pred_fallthru
          _
        // Predicated region
        $region17: #{tpu_custom_call.1} parent=11 // pred_check
          %p138 = pneg %p84
        $region18: #{tpu_custom_call.1} parent=11 // pred_check_branch
          %140 = sbr.rel (%p138) target = $region20
        $region19: #{tpu_custom_call.1} parent=11 // pred_region
          _
        $region20: #{tpu_custom_call.1} parent=11 // pred_fallthru
          _
      $region12: #{tpu_custom_call.1} parent=5 // pred_fallthru
        _
      %p141 = scmp.lt.s32.totalorder %s16, 2
      // Predicated region
      $region21: #{tpu_custom_call.1} parent=5 // pred_check
        %p142 = pneg %p141
      $region22: #{tpu_custom_call.1} parent=5 // pred_check_branch
        %144 = sbr.rel (%p142) target = $region24
      $region23: #{tpu_custom_call.1} parent=5 // pred_region
        // Predicated region
        $region25: #{tpu_custom_call.1} parent=23 // pred_check
          %p145 = pneg %p36
        $region26: #{tpu_custom_call.1} parent=23 // pred_check_branch
          %147 = sbr.rel (%p145) target = $region28
        $region27: #{tpu_custom_call.1} parent=23 // pred_region
          %s148 = sand.u32 %s26, 1
          %s149 = scalar_lea.sflag [#allocation3], %s148
          %s150 = sand.u32 %s26, 1
          %s151 = smul.addr %s150, 4
          %s152 = scalar_lea.vmem [#allocation2], %s151
          %s154 = ssub.s32 64, 64
          %155 = vsyncadd %s149, %s154
          %s156 = smul.addr %s16, 64
          %s157 = scalar_lea.hbm %s0, %s156
          %s159 = sshll.u32 %s152, 4
          %s160 = int_to_ptr.vmem [resolvable:$true] %s159
          %162 = dma.hbm_to_vmem [thread:$0]  %s157, 64, %s160, %s149
        $region28: #{tpu_custom_call.1} parent=23 // pred_fallthru
          _
      $region24: #{tpu_custom_call.1} parent=5 // pred_fallthru
        _
      %p163 = scmp.le.s32.totalorder 1, %s16
      %p164 = scmp.lt.s32.totalorder %s16, 3
      %p165 = pnand %p163, %p164
      %p166 = pneg %p165
      // Predicated region
      $region29: #{tpu_custom_call.1} parent=5 // pred_check
        _
      $region30: #{tpu_custom_call.1} parent=5 // pred_check_branch
        %168 = sbr.rel (%p165) target = $region32
      $region31: #{tpu_custom_call.1} parent=5 // pred_region
        %s169 = ssub.s32 %s16, 1
        %s170 = sand.u32 %s29, 1
        %s171 = scalar_lea.sflag [#allocation3], %s170
        %s172 = sand.u32 %s29, 1
        %s173 = smul.addr %s172, 4
        %s174 = scalar_lea.vmem [#allocation2], %s173
        // Predicated region
        $region33: #{tpu_custom_call.1} parent=31 // pred_check
          %p175 = pneg %p42
        $region34: #{tpu_custom_call.1} parent=31 // pred_check_branch
          %177 = sbr.rel (%p175) target = $region36
        $region35: #{tpu_custom_call.1} parent=31 // pred_region
          %178 = dma.done %s171, 64
        $region36: #{tpu_custom_call.1} parent=31 // pred_fallthru
          _
        // Predicated region
        $region37: #{tpu_custom_call.1} parent=31 // pred_check
          %p179 = pneg %p63
        $region38: #{tpu_custom_call.1} parent=31 // pred_check_branch
          %181 = sbr.rel (%p179) target = $region40
        $region39: #{tpu_custom_call.1} parent=31 // pred_region
          %182 = dma.done [#allocation6], 256
        $region40: #{tpu_custom_call.1} parent=31 // pred_fallthru
          _
        %s183 = sand.u32 %s29, 1
        %s184 = scalar_lea.sflag [#allocation3], %s183
        %s185 = sand.u32 %s29, 1
        %s186 = smul.addr %s185, 4
        %s187 = scalar_lea.vmem [#allocation2], %s186
        %p188 = pneg %p42
        %p189 = pneg %p39
        %p190 = pneg %p63
        %p191 = pneg %p60
        %p192 = pneg %p84
        %p193 = pneg %p81
        %p194 = pneg %p110
        %p195 = pneg %p107
        %s196 = sand.u32 %s97, 1
        %s197 = scalar_lea.sflag [#allocation4], %s196
        %s198 = sand.u32 %s97, 1
        %s199 = smul.addr %s198, 4
        %s200 = scalar_lea.vmem [#allocation7], %s199
        %v202 = vld [vmem:[%s174] sm:$0xf]
        %v203 = vld [vmem:[#allocation5] sm:$0xf]
        %v204 = vld [vmem:[#allocation5 + $0x4] sm:$0xf]
        %v205 = vld [vmem:[#allocation5 + $0x8] sm:$0xf]
        %v206 = vld [vmem:[#allocation5 + $0xc] sm:$0xf]
        %v207 = vld [vmem:[%s2] sm:$0x1]
        %v208 = vunpack.c.l.bf16 %v207
        %v209 = vlaneseq
        %v210 = vshrl.u32 %v209, 7
        %v211 = vsub.s32 0, %v210
        %v212 = vrot.slane %v208, %v211
        %v217 = vunpack.c.l.b16 %v203
        %v218 = vunpack.c.l.b16 %v204
        %v219 = vunpack.c.l.b16 %v205
        %v220 = vunpack.c.l.b16 %v206
        %v221 = vpack.c.b16 %v218, %v217
        %v222 = vpack.c.b16 %v220, %v219
        %vm225 = vcmask 261120
        %v227 = vsel %vm225, %v202, 0
        %229 = vmatprep.subr.bf16.mxu0 0
        %230 = vmatpush1.bf16.msra.mxu0 %v221
        %231 = vmatprep.subr.bf16.mxu0 0
        %232 = vmatpush1.bf16.msra.mxu0 %v222
        %233 = vmatprep.subr.bf16.mxu0 0
        %234 = vmatpush1.bf16.msra.mxu0 0
        %235 = vmatprep.subr.bf16.mxu0 0
        %236 = vmatpush1.bf16.msra.mxu0 0
        %237 = vmatprep.subr.bf16.mxu0 0
        %238 = vmatpush1.bf16.msra.mxu0 0
        %239 = vmatprep.subr.bf16.mxu0 0
        %240 = vmatpush1.bf16.msra.mxu0 0
        %241 = vmatprep.subr.bf16.mxu0 0
        %242 = vmatpush1.bf16.msra.mxu0 0
        %243 = vmatprep.subr.bf16.mxu0 0
        %244 = vmatpush1.bf16.msra.mxu0 0
        %245 = vmatprep.subr.bf16.mxu0 0
        %246 = vmatpush1.bf16.msra.mxu0 0
        %247 = vmatprep.subr.bf16.mxu0 0
        %248 = vmatpush1.bf16.msra.mxu0 0
        %249 = vmatprep.subr.bf16.mxu0 0
        %250 = vmatpush1.bf16.msra.mxu0 0
        %251 = vmatprep.subr.bf16.mxu0 0
        %252 = vmatpush1.bf16.msra.mxu0 0
        %253 = vmatprep.subr.bf16.mxu0 0
        %254 = vmatpush1.bf16.msra.mxu0 0
        %255 = vmatprep.subr.bf16.mxu0 0
        %256 = vmatpush1.bf16.msra.mxu0 0
        %257 = vmatprep.subr.bf16.mxu0 0
        %258 = vmatpush1.bf16.msra.mxu0 0
        %259 = vmatprep.subr.bf16.mxu0 0
        %260 = vmatpush1.bf16.msra.mxu0 0
        %261 = vmatprep.mubr.bf16.mxu0 0
        %262 = vmatmul.mubr.bf16.gmra.mrb[0].mxu0 %v227
        %v263 = vpop.f32.mrb[0].mxu0
        %v264 = vadd.f32 %v212, %v263
        %v265 = vpop.f32.mrb[0].mxu0
        %v266 = vpop.f32.mrb[0].mxu0
        %v267 = vpop.f32.mrb[0].mxu0
        %268 = vdwg.mxu0
        %v269 = vmax.f32 %v264, 0.0
        %270 = vadd.xlane.f32.xlu0 %v269
        %v271 = vpop.xlane.xlu0 %270
        %v272 = vmul.f32 %v269, %v269
        %273 = vadd.xlane.f32.xlu0 %v272
        %v274 = vpop.xlane.xlu0 %273
        %v275 = vmul.f32 %v271, 0.03125
        %v276 = vmul.f32 %v274, 0.03125
        %v277 = vmul.f32 %v275, %v275
        %v278 = vsub.f32 %v276, %v277
        %v279 = vmax.f32 %v278, 0.0
        %v280 = vadd.f32 %v279, 1e-05
        %v281 = vrsqrt.pop %v280
        %v282 = vsub.f32 %v269, %v275
        %v283 = vmul.f32 %v282, %v281
        %v284 = vlaneseq
        %v285 = vshrl.u32 %v284, 7
        %v286 = vsub.s32 1, %v285
        %v287 = vrot.slane %v208, %v286
        %v288 = vmul.f32 %v283, %v287
        %v289 = vld [vmem:[%s2] sm:$0x2]
        %v290 = vunpack.c.l.bf16 %v289
        %v291 = vlaneseq
        %v292 = vshrl.u32 %v291, 7
        %v293 = vsub.s32 2, %v292
        %v294 = vrot.slane %v290, %v293
        %v295 = vadd.f32 %v288, %v294
        %v296 = vpack.c.bf16 %v295, %v295
        %297 = vst [vmem:[%s200] sm:$0xf] %v296
        %s298 = sand.u32 %s97, 1
        %s299 = scalar_lea.sflag [#allocation4], %s298
        %s300 = sand.u32 %s97, 1
        %s301 = smul.addr %s300, 4
        %s302 = scalar_lea.vmem [#allocation7], %s301
        // Predicated region
        $region41: #{tpu_custom_call.1} parent=31 // pred_check
          %p303 = pneg %p107
        $region42: #{tpu_custom_call.1} parent=31 // pred_check_branch
          %305 = sbr.rel (%p303) target = $region44
        $region43: #{tpu_custom_call.1} parent=31 // pred_region
          %s307 = ssub.s32 64, 64
          %308 = vsyncadd %s299, %s307
          %s309 = smul.addr %s21, 64
          %s310 = scalar_lea.hbm %s3, %s309
          %s312 = sshll.u32 %s302, 4
          %s313 = int_to_ptr.vmem [resolvable:$true] %s312
          %315 = dma.vmem_to_hbm [thread:$0]  %s313, 64, %s310, %s299
        $region44: #{tpu_custom_call.1} parent=31 // pred_fallthru
          _
      $region32: #{tpu_custom_call.1} parent=5 // pred_fallthru
        _
      %p316 = scmp.le.s32.totalorder 2, %s16
      // Predicated region
      $region45: #{tpu_custom_call.1} parent=5 // pred_check
        %p317 = pneg %p316
      $region46: #{tpu_custom_call.1} parent=5 // pred_check_branch
        %319 = sbr.rel (%p317) target = $region48
      $region47: #{tpu_custom_call.1} parent=5 // pred_region
        %s320 = ssub.s32 %s16, 2
        // Predicated region
        $region49: #{tpu_custom_call.1} parent=47 // pred_check
          %p321 = pneg %p113
        $region50: #{tpu_custom_call.1} parent=47 // pred_check_branch
          %323 = sbr.rel (%p321) target = $region52
        $region51: #{tpu_custom_call.1} parent=47 // pred_region
          %s324 = sand.u32 %s98, 1
          %s325 = scalar_lea.sflag [#allocation4], %s324
          %s326 = sand.u32 %s98, 1
          %s327 = smul.addr %s326, 4
          %s328 = scalar_lea.vmem [#allocation7], %s327
          %329 = dma.done %s325, 64
        $region52: #{tpu_custom_call.1} parent=47 // pred_fallthru
          _
      $region48: #{tpu_custom_call.1} parent=5 // pred_fallthru
        _
    $region6: #{tpu_custom_call.1} parent=1 // loop_footer
      %s20 = sadd.s32 1, %s16
    $region7: #{tpu_custom_call.1} parent=1 // loop_footer_branch
      %15 = sbr.rel target = $region3
    $region8: #{tpu_custom_call.1} parent=1 // loop_exit
      _
    %330 = vsyncpa [#allocation3], 1
    %s331 = scalar_lea.sflag [#allocation3], 1
    %332 = vsyncpa %s331, 1
    %333 = vsyncpa [#allocation6], 1
    %334 = vsyncpa [#allocation4], 1
    %s335 = scalar_lea.sflag [#allocation4], 1
    %336 = vsyncpa %s335, 1

// kernel: tpu_custom_call.1
$region0: #{tpu_custom_call.1}
  #allocation0 [shape = 'u32[]', space=smem, size = 0x4, offset = 0x4, fixed_abs, tag = 'smem constant byte address 0x4 - core index']
  #allocation1 [shape = 'u32[144,128]{1,0:T(1,128)}', space=vmem, size = 0x12000, scoped, tag = 'internal scratch']
  %s0 = inlined_call_operand.hbm [shape: bf16[16,32], index: 0, kind: input, shape index: {}]
  %s1 = inlined_call_operand.hbm [shape: bf16[32,128], index: 1, kind: input, shape index: {}]
  %s2 = inlined_call_operand.vmem [shape: bf16[3,128], index: 2, kind: input, shape index: {}]
  %s3 = inlined_call_operand.hbm [shape: bf16[16,128], index: 3, kind: output, shape index: {}]
  %s4 = sld [smem:[#allocation0]]
  $region53: #{tpu_custom_call.1} parent=0
    _
  %s6 = ssub.s32 1, %s4
  %s7 = scalar_select 0, %s6, %s4
  $region1: #{tpu_custom_call.1} parent=0
    #allocation2 [shape = 'u8[4096]{0}', space=vmem, size = 0x1000, scoped, tag = 'input window, operand 0']
    #allocation3 [shape = 's32[2]{0}', space=sflag, size = 0x8, scoped, tag = 'scoped memory for tpu_custom_call.1']
    #allocation4 [shape = 's32[2]{0}', space=sflag, size = 0x8, scoped, tag = 'scoped memory for tpu_custom_call.1']
    #allocation5 [shape = 'u8[8192]{0}', space=vmem, size = 0x2000, scoped, tag = 'input window, operand 1, single buffered']
    #allocation6 [shape = 's32[1]{0}', space=sflag, size = 0x4, scoped, tag = 'scoped memory for tpu_custom_call.1']
    #allocation7 [shape = 'u8[4096]{0}', space=vmem, size = 0x1000, scoped, tag = 'output window, operand 0']
    %8 = vsyncpa [#allocation3], 0
    %s9 = scalar_lea.sflag [#allocation3], 1
    %10 = vsyncpa %s9, 0
    %11 = vsyncpa [#allocation6], 0
    %12 = vsyncpa [#allocation4], 0
    %s13 = scalar_lea.sflag [#allocation4], 1
    %14 = vsyncpa %s13, 0
    loop: start=0, step=1, limit=4
    $region2: #{tpu_custom_call.1} parent=1 // loop_pre_header
      _
    $region3: #{tpu_custom_call.1} parent=1 // loop_header
      %s16 = sphi 0, %s20
      %p17 = scmp.ge.s32.totalorder %s16, 4
      %s26 = sphi 0, %s28
      %s29 = sphi 0, %s26
      %s30 = sphi 0, %s29
      %s46 = sphi 0, %s30
      %s50 = sphi 0, %s50
      %s52 = sphi 0, %s50
      %s53 = sphi 0, %s52
      %s67 = sphi 0, %s53
      %s71 = sphi 0, %s71
      %s73 = sphi 0, %s71
      %s74 = sphi 0, %s73
      %s88 = sphi 0, %s74
      %s94 = sphi 0, %s96
      %s97 = sphi 0, %s94
      %s98 = sphi 0, %s97
      %s114 = sphi 0, %s98
    $region4: #{tpu_custom_call.1} parent=1 // loop_header_branch
      %19 = sbr.rel (%p17) target = $region8
    $region5: #{tpu_custom_call.1} parent=1 // loop_body
      %s21 = ssub.s32 %s16, 1
      %s22 = ssub.s32 %s16, 2
      %s23 = sadd.s32 %s16, 1
      %s24 = ssub.s32 %s16, %s23
      %p25 = scmp.eq.s32.totalorder %s24, 0
      %s27 = sadd.s32 %s26, 1
      %s28 = scalar_select %p25, %s26, %s27
      %p31 = pneg %p25
      %p32 = scmp.eq.s32.totalorder %s16, 1
      %p33 = por %p31, %p32
      %p34 = scmp.ne.s32.totalorder %s26, %s29
      %p35 = scmp.eq.s32.totalorder %s16, 0
      %p36 = por %p34, %p35
      %p37 = scmp.ne.s32.totalorder %s26, %s29
      %p38 = scmp.eq.s32.totalorder %s21, 1
      %p39 = por %p37, %p38
      %p40 = scmp.ne.s32.totalorder %s29, %s30
      %p41 = scmp.eq.s32.totalorder %s21, 0
      %p42 = por %p40, %p41
      %p43 = scmp.ne.s32.totalorder %s29, %s30
      %p44 = scmp.eq.s32.totalorder %s22, 1
      %p45 = por %p43, %p44
      %p47 = scmp.ne.s32.totalorder %s30, %s46
      %p48 = scmp.eq.s32.totalorder %s22, 0
      %p49 = por %p47, %p48
      %s51 = sadd.s32 %s50, 1
      %p54 = scmp.eq.s32.totalorder %s16, 1
      %p55 = scmp.ne.s32.totalorder %s50, %s52
      %p56 = scmp.eq.s32.totalorder %s16, 0
      %p57 = por %p55, %p56
      %p58 = scmp.ne.s32.totalorder %s50, %s52
      %p59 = scmp.eq.s32.totalorder %s21, 1
      %p60 = por %p58, %p59
      %p61 = scmp.ne.s32.totalorder %s52, %s53
      %p62 = scmp.eq.s32.totalorder %s21, 0
      %p63 = por %p61, %p62
      %p64 = scmp.ne.s32.totalorder %s52, %s53
      %p65 = scmp.eq.s32.totalorder %s22, 1
      %p66 = por %p64, %p65
      %p68 = scmp.ne.s32.totalorder %s53, %s67
      %p69 = scmp.eq.s32.totalorder %s22, 0
      %p70 = por %p68, %p69
      %s72 = sadd.s32 %s71, 1
      %p75 = scmp.eq.s32.totalorder %s16, 1
      %p76 = scmp.ne.s32.totalorder %s71, %s73
      %p77 = scmp.eq.s32.totalorder %s16, 0
      %p78 = por %p76, %p77
      %p79 = scmp.ne.s32.totalorder %s71, %s73
      %p80 = scmp.eq.s32.totalorder %s21, 1
      %p81 = por %p79, %p80
      %p82 = scmp.ne.s32.totalorder %s73, %s74
      %p83 = scmp.eq.s32.totalorder %s21, 0
      %p84 = por %p82, %p83
      %p85 = scmp.ne.s32.totalorder %s73, %s74
      %p86 = scmp.eq.s32.totalorder %s22, 1
      %p87 = por %p85, %p86
      %p89 = scmp.ne.s32.totalorder %s74, %s88
      %p90 = scmp.eq.s32.totalorder %s22, 0
      %p91 = por %p89, %p90
      %s92 = ssub.s32 %s16, %s23
      %p93 = scmp.eq.s32.totalorder %s92, 0
      %s95 = sadd.s32 %s94, 1
      %s96 = scalar_select %p93, %s94, %s95
      %p99 = pneg %p93
      %p100 = scmp.eq.s32.totalorder %s16, 1
      %p101 = por %p99, %p100
      %p102 = scmp.ne.s32.totalorder %s94, %s97
      %p103 = scmp.eq.s32.totalorder %s16, 0
      %p104 = por %p102, %p103
      %p105 = scmp.ne.s32.totalorder %s94, %s97
      %p106 = scmp.eq.s32.totalorder %s21, 1
      %p107 = por %p105, %p106
      %p108 = scmp.ne.s32.totalorder %s97, %s98
      %p109 = scmp.eq.s32.totalorder %s21, 0
      %p110 = por %p108, %p109
      %p111 = scmp.ne.s32.totalorder %s97, %s98
      %p112 = scmp.eq.s32.totalorder %s22, 1
      %p113 = por %p111, %p112
      %p115 = scmp.ne.s32.totalorder %s98, %s114
      %p116 = scmp.eq.s32.totalorder %s22, 0
      %p117 = por %p115, %p116
      %p118 = scmp.le.s32.totalorder 1, %s16
      %p119 = scmp.lt.s32.totalorder %s16, 3
      %p120 = pnand %p118, %p119
      %p121 = pneg %p120
      // Predicated region
      $region9: #{tpu_custom_call.1} parent=5 // pred_check
        _
      $region10: #{tpu_custom_call.1} parent=5 // pred_check_branch
        %123 = sbr.rel (%p120) target = $region12
      $region11: #{tpu_custom_call.1} parent=5 // pred_region
        %s124 = ssub.s32 %s16, 1
        // Predicated region
        $region13: #{tpu_custom_call.1} parent=11 // pred_check
          %p125 = pneg %p63
        $region14: #{tpu_custom_call.1} parent=11 // pred_check_branch
          %127 = sbr.rel (%p125) target = $region16
        $region15: #{tpu_custom_call.1} parent=11 // pred_region
          %s129 = ssub.s32 256, 256
          %130 = vsyncadd [#allocation6], %s129
          %s131 = sshll.u32 [#allocation5], 4
          %s132 = int_to_ptr.vmem [resolvable:$true] %s131
          %137 = dma.hbm_to_vmem [thread:$0]  %s1, 256, %s132, [#allocation6], 64, 64, 4
        $region16: #{tpu_custom_call.1} parent=11 // pred_fallthru
          _
        // Predicated region
        $region17: #{tpu_custom_call.1} parent=11 // pred_check
          %p138 = pneg %p84
        $region18: #{tpu_custom_call.1} parent=11 // pred_check_branch
          %140 = sbr.rel (%p138) target = $region20
        $region19: #{tpu_custom_call.1} parent=11 // pred_region
          _
        $region20: #{tpu_custom_call.1} parent=11 // pred_fallthru
          _
      $region12: #{tpu_custom_call.1} parent=5 // pred_fallthru
        _
      %p141 = scmp.lt.s32.totalorder %s16, 2
      // Predicated region
      $region21: #{tpu_custom_call.1} parent=5 // pred_check
        %p142 = pneg %p141
      $region22: #{tpu_custom_call.1} parent=5 // pred_check_branch
        %144 = sbr.rel (%p142) target = $region24
      $region23: #{tpu_custom_call.1} parent=5 // pred_region
        // Predicated region
        $region25: #{tpu_custom_call.1} parent=23 // pred_check
          %p145 = pneg %p36
        $region26: #{tpu_custom_call.1} parent=23 // pred_check_branch
          %147 = sbr.rel (%p145) target = $region28
        $region27: #{tpu_custom_call.1} parent=23 // pred_region
          %s148 = sand.u32 %s26, 1
          %s149 = scalar_lea.sflag [#allocation3], %s148
          %s150 = sand.u32 %s26, 1
          %s151 = smul.addr %s150, 4
          %s152 = scalar_lea.vmem [#allocation2], %s151
          %s154 = ssub.s32 64, 64
          %155 = vsyncadd %s149, %s154
          %s156 = smul.addr %s16, 64
          %s157 = scalar_lea.hbm %s0, %s156
          %s159 = sshll.u32 %s152, 4
          %s160 = int_to_ptr.vmem [resolvable:$true] %s159
          %162 = dma.hbm_to_vmem [thread:$0]  %s157, 64, %s160, %s149
        $region28: #{tpu_custom_call.1} parent=23 // pred_fallthru
          _
      $region24: #{tpu_custom_call.1} parent=5 // pred_fallthru
        _
      %p163 = scmp.le.s32.totalorder 1, %s16
      %p164 = scmp.lt.s32.totalorder %s16, 3
      %p165 = pnand %p163, %p164
      %p166 = pneg %p165
      // Predicated region
      $region29: #{tpu_custom_call.1} parent=5 // pred_check
        _
      $region30: #{tpu_custom_call.1} parent=5 // pred_check_branch
        %168 = sbr.rel (%p165) target = $region32
      $region31: #{tpu_custom_call.1} parent=5 // pred_region
        %s169 = ssub.s32 %s16, 1
        %s170 = sand.u32 %s29, 1
        %s171 = scalar_lea.sflag [#allocation3], %s170
        %s172 = sand.u32 %s29, 1
        %s173 = smul.addr %s172, 4
        %s174 = scalar_lea.vmem [#allocation2], %s173
        // Predicated region
        $region33: #{tpu_custom_call.1} parent=31 // pred_check
          %p175 = pneg %p42
        $region34: #{tpu_custom_call.1} parent=31 // pred_check_branch
          %177 = sbr.rel (%p175) target = $region36
        $region35: #{tpu_custom_call.1} parent=31 // pred_region
          %178 = dma.done %s171, 64
        $region36: #{tpu_custom_call.1} parent=31 // pred_fallthru
          _
        // Predicated region
        $region37: #{tpu_custom_call.1} parent=31 // pred_check
          %p179 = pneg %p63
        $region38: #{tpu_custom_call.1} parent=31 // pred_check_branch
          %181 = sbr.rel (%p179) target = $region40
        $region39: #{tpu_custom_call.1} parent=31 // pred_region
          %182 = dma.done [#allocation6], 256
        $region40: #{tpu_custom_call.1} parent=31 // pred_fallthru
          _
        %s183 = sand.u32 %s29, 1
        %s184 = scalar_lea.sflag [#allocation3], %s183
        %s185 = sand.u32 %s29, 1
        %s186 = smul.addr %s185, 4
        %s187 = scalar_lea.vmem [#allocation2], %s186
        %p188 = pneg %p42
        %p189 = pneg %p39
        %p190 = pneg %p63
        %p191 = pneg %p60
        %p192 = pneg %p84
        %p193 = pneg %p81
        %p194 = pneg %p110
        %p195 = pneg %p107
        %s196 = sand.u32 %s97, 1
        %s197 = scalar_lea.sflag [#allocation4], %s196
        %s198 = sand.u32 %s97, 1
        %s199 = smul.addr %s198, 4
        %s200 = scalar_lea.vmem [#allocation7], %s199
        %v202 = vld [vmem:[%s174] sm:$0xf]
        %v203 = vld [vmem:[#allocation5] sm:$0xf]
        %v204 = vld [vmem:[#allocation5 + $0x4] sm:$0xf]
        %v205 = vld [vmem:[#allocation5 + $0x8] sm:$0xf]
        %v206 = vld [vmem:[#allocation5 + $0xc] sm:$0xf]
        %v207 = vld [vmem:[%s2] sm:$0x1]
        %v208 = vunpack.c.l.bf16 %v207
        %v209 = vlaneseq
        %v210 = vshrl.u32 %v209, 7
        %v211 = vsub.s32 0, %v210
        %v212 = vrot.slane %v208, %v211
        %v217 = vunpack.c.l.b16 %v203
        %v218 = vunpack.c.l.b16 %v204
        %v219 = vunpack.c.l.b16 %v205
        %v220 = vunpack.c.l.b16 %v206
        %v221 = vpack.c.b16 %v218, %v217
        %v222 = vpack.c.b16 %v220, %v219
        %vm225 = vcmask 261120
        %v227 = vsel %vm225, %v202, 0
        %229 = vmatprep.subr.bf16.mxu0 0
        %230 = vmatpush1.bf16.msra.mxu0 %v221
        %231 = vmatprep.subr.bf16.mxu0 0
        %232 = vmatpush1.bf16.msra.mxu0 %v222
        %233 = vmatprep.subr.bf16.mxu0 0
        %234 = vmatpush1.bf16.msra.mxu0 0
        %235 = vmatprep.subr.bf16.mxu0 0
        %236 = vmatpush1.bf16.msra.mxu0 0
        %237 = vmatprep.subr.bf16.mxu0 0
        %238 = vmatpush1.bf16.msra.mxu0 0
        %239 = vmatprep.subr.bf16.mxu0 0
        %240 = vmatpush1.bf16.msra.mxu0 0
        %241 = vmatprep.subr.bf16.mxu0 0
        %242 = vmatpush1.bf16.msra.mxu0 0
        %243 = vmatprep.subr.bf16.mxu0 0
        %244 = vmatpush1.bf16.msra.mxu0 0
        %245 = vmatprep.subr.bf16.mxu0 0
        %246 = vmatpush1.bf16.msra.mxu0 0
        %247 = vmatprep.subr.bf16.mxu0 0
        %248 = vmatpush1.bf16.msra.mxu0 0
        %249 = vmatprep.subr.bf16.mxu0 0
        %250 = vmatpush1.bf16.msra.mxu0 0
        %251 = vmatprep.subr.bf16.mxu0 0
        %252 = vmatpush1.bf16.msra.mxu0 0
        %253 = vmatprep.subr.bf16.mxu0 0
        %254 = vmatpush1.bf16.msra.mxu0 0
        %255 = vmatprep.subr.bf16.mxu0 0
        %256 = vmatpush1.bf16.msra.mxu0 0
        %257 = vmatprep.subr.bf16.mxu0 0
        %258 = vmatpush1.bf16.msra.mxu0 0
        %259 = vmatprep.subr.bf16.mxu0 0
        %260 = vmatpush1.bf16.msra.mxu0 0
        %261 = vmatprep.mubr.bf16.mxu0 0
        %262 = vmatmul.mubr.bf16.gmra.mrb[0].mxu0 %v227
        %v263 = vpop.f32.mrb[0].mxu0
        %v264 = vadd.f32 %v212, %v263
        %v265 = vpop.f32.mrb[0].mxu0
        %v266 = vpop.f32.mrb[0].mxu0
        %v267 = vpop.f32.mrb[0].mxu0
        %268 = vdwg.mxu0
        %v269 = vmax.f32 %v264, 0.0
        %270 = vadd.xlane.f32.xlu0 %v269
        %v271 = vpop.xlane.xlu0 %270
        %v272 = vmul.f32 %v269, %v269
        %273 = vadd.xlane.f32.xlu0 %v272
        %v274 = vpop.xlane.xlu0 %273
        %v275 = vmul.f32 %v271, 0.03125
        %v276 = vmul.f32 %v274, 0.03125
        %v277 = vmul.f32 %v275, %v275
        %v278 = vsub.f32 %v276, %v277
        %v279 = vmax.f32 %v278, 0.0
        %v280 = vadd.f32 %v279, 1e-05
        %v281 = vrsqrt.pop %v280
        %v282 = vsub.f32 %v269, %v275
        %v283 = vmul.f32 %v282, %v281
        %v284 = vlaneseq
        %v285 = vshrl.u32 %v284, 7
        %v286 = vsub.s32 1, %v285
        %v287 = vrot.slane %v208, %v286
        %v288 = vmul.f32 %v283, %v287
        %v289 = vld [vmem:[%s2] sm:$0x2]
        %v290 = vunpack.c.l.bf16 %v289
        %v291 = vlaneseq
        %v292 = vshrl.u32 %v291, 7
        %v293 = vsub.s32 2, %v292
        %v294 = vrot.slane %v290, %v293
        %v295 = vadd.f32 %v288, %v294
        %v296 = vpack.c.bf16 %v295, %v295
        %297 = vst [vmem:[%s200] sm:$0xf] %v296
        %s298 = sand.u32 %s97, 1
        %s299 = scalar_lea.sflag [#allocation4], %s298
        %s300 = sand.u32 %s97, 1
        %s301 = smul.addr %s300, 4
        %s302 = scalar_lea.vmem [#allocation7], %s301
        // Predicated region
        $region41: #{tpu_custom_call.1} parent=31 // pred_check
          %p303 = pneg %p107
        $region42: #{tpu_custom_call.1} parent=31 // pred_check_branch
          %305 = sbr.rel (%p303) target = $region44
        $region43: #{tpu_custom_call.1} parent=31 // pred_region
          %s307 = ssub.s32 64, 64
          %308 = vsyncadd %s299, %s307
          %s309 = smul.addr %s21, 64
          %s310 = scalar_lea.hbm %s3, %s309
          %s312 = sshll.u32 %s302, 4
          %s313 = int_to_ptr.vmem [resolvable:$true] %s312
          %315 = dma.vmem_to_hbm [thread:$0]  %s313, 64, %s310, %s299
        $region44: #{tpu_custom_call.1} parent=31 // pred_fallthru
          _
      $region32: #{tpu_custom_call.1} parent=5 // pred_fallthru
        _
      %p316 = scmp.le.s32.totalorder 2, %s16
      // Predicated region
      $region45: #{tpu_custom_call.1} parent=5 // pred_check
        %p317 = pneg %p316
      $region46: #{tpu_custom_call.1} parent=5 // pred_check_branch
        %319 = sbr.rel (%p317) target = $region48
      $region47: #{tpu_custom_call.1} parent=5 // pred_region
        %s320 = ssub.s32 %s16, 2
        // Predicated region
        $region49: #{tpu_custom_call.1} parent=47 // pred_check
          %p321 = pneg %p113
        $region50: #{tpu_custom_call.1} parent=47 // pred_check_branch
          %323 = sbr.rel (%p321) target = $region52
        $region51: #{tpu_custom_call.1} parent=47 // pred_region
          %s324 = sand.u32 %s98, 1
          %s325 = scalar_lea.sflag [#allocation4], %s324
          %s326 = sand.u32 %s98, 1
          %s327 = smul.addr %s326, 4
          %s328 = scalar_lea.vmem [#allocation7], %s327
          %329 = dma.done %s325, 64
        $region52: #{tpu_custom_call.1} parent=47 // pred_fallthru
          _
      $region48: #{tpu_custom_call.1} parent=5 // pred_fallthru
        _
    $region6: #{tpu_custom_call.1} parent=1 // loop_footer
      %s20 = sadd.s32 1, %s16
    $region7: #{tpu_custom_call.1} parent=1 // loop_footer_branch
      %15 = sbr.rel target = $region3
    $region8: #{tpu_custom_call.1} parent=1 // loop_exit
      _
    %330 = vsyncpa [#allocation3], 1
    %s331 = scalar_lea.sflag [#allocation3], 1
    %332 = vsyncpa %s331, 1
    %333 = vsyncpa [#allocation6], 1
    %334 = vsyncpa [#allocation4], 1
    %s335 = scalar_lea.sflag [#allocation4], 1
    %336 = vsyncpa %s335, 1

</llo_original>
